<compile_context>
chip_gen: v7x
topology: tpu7x:2x2x1
jax: 0.10.0
libtpu: 0.0.40
codegen_flags: <defaults>
</compile_context>

<pallas_src>
import jax
import jax.numpy as jnp
from jax.experimental import pallas as pl
from jax.experimental.pallas import tpu as pltpu

STATE_DIM = 16      # state_dim
H0 = 32             # hidden_sizes[0]  (embedding / LSTM input size)
H = 32              # hidden_sizes[1]  (LSTM hidden size) -> 4*H = 128 = one lane tile
ACTION_DIM = 4      # action_dim
T = 8               # trajectory length (batch of timesteps)
LANE = 128          # TPU lane width == 4*H
NEG = -1e30         # softmax mask value for padded action lanes

# Row layout of the packed weight slab (all offsets are multiples of 8 sublanes).
R_W = 0                    # rows  0:16   folded input->gates weight  (STATE_DIM, 4H)
R_U = 16                   # rows 16:48   recurrent weight  whh       (H, 4H)
R_BIN = 48                 # row  48      folded gate bias            (1, 4H)
R_WO = 56                  # rows 56:88   output weight (lane-padded) (H, LANE)
R_BO = 88                  # row  88      output bias   (lane-padded) (1, LANE)
R_TOT = 96


def disc_lstm_policy_kernel(mask_ref, x_ref, w_ref, probs_ref):
    """Whole forward pass for one trajectory.

    mask_ref : (T,)  SMEM  reset mask: mask[t] = not_dones[t-1], mask[0] = 0
    x_ref    : (T, STATE_DIM) VMEM  input states
    w_ref    : (R_TOT, LANE)  VMEM  packed weights (row layout above)
    probs_ref: (T, LANE)      VMEM  softmax probs, real actions in lanes [0, ACTION_DIM)
    """
    n_steps = x_ref.shape[0]

    w_in = w_ref[R_W:R_W + STATE_DIM, :]      # (S, 4H)  == We @ Wih
    whh = w_ref[R_U:R_U + H, :]               # (H, 4H)
    b_in = w_ref[R_BIN:R_BIN + 1, :]          # (1, 4H)  == be @ Wih + b_ih + b_hh
    w_o = w_ref[R_WO:R_WO + H, :]             # (H, LANE) zero-padded past ACTION_DIM
    b_o = w_ref[R_BO:R_BO + 1, :]             # (1, LANE) -1e30 past ACTION_DIM

    # Input-side contribution to all gates for every timestep in one MXU pass: (T, 4H)
    gx = jnp.dot(x_ref[...], w_in, preferred_element_type=jnp.float32) + b_in

    h = jnp.zeros((1, H), jnp.float32)
    c = jnp.zeros((1, H), jnp.float32)
    hs = []
    for t in range(n_steps):                  # static unroll: T is small and fixed
        m = mask_ref[t]                       # scalar SMEM read; 0.0 => episode reset
        h = h * m
        c = c * m
        g = gx[t:t + 1, :] + jnp.dot(h, whh, preferred_element_type=jnp.float32)
        # Full-lane transcendentals (EUP); sigmoid via tanh identity (no VPU divide).
        sg = 0.5 * jnp.tanh(0.5 * g) + 0.5    # sigmoid of all gates, (1, 4H)
        tg = jnp.tanh(g)                      # tanh of all gates,    (1, 4H)
        i_g = sg[:, 0 * H:1 * H]
        f_g = sg[:, 1 * H:2 * H]
        g_g = tg[:, 2 * H:3 * H]
        o_g = sg[:, 3 * H:4 * H]
        c = f_g * c + i_g * g_g
        h = o_g * jnp.tanh(c)
        hs.append(h)
    hidden = jnp.concatenate(hs, axis=0)      # (T, H); stays in vregs

    # Output layer + softmax, lane-dense (T, 128) store.  Padded lanes carry a
    # -1e30 bias so they contribute exp(-inf) == 0 to the softmax sum.
    logits = jnp.dot(hidden, w_o, preferred_element_type=jnp.float32) + b_o
    z = logits - jnp.max(logits, axis=-1, keepdims=True)
    e = jnp.exp(z)
    probs_ref[...] = e / jnp.sum(e, axis=-1, keepdims=True)


def disc_lstm_policy_forward(params, x, not_dones):
    """Equivalent of DiscLSTMPolicy.forward(x, not_dones) for x.size(0) != 1."""
    t_steps = x.shape[0]

    # --- one-time weight prep (pure JAX, outside the kernel) -----------------
    w_in = params['we'] @ params['wih']                       # (S, 4H)
    b_in = params['be'] @ params['wih'] + params['bias']      # (1, 4H)
    wo_pad = jnp.concatenate(
        [params['wo'], jnp.zeros((H, LANE - ACTION_DIM), jnp.float32)], axis=1)
    bo_pad = jnp.concatenate(
        [params['bo'], jnp.full((1, LANE - ACTION_DIM), NEG, jnp.float32)], axis=1)

    packed = jnp.zeros((R_TOT, LANE), jnp.float32)
    packed = packed.at[R_W:R_W + STATE_DIM].set(w_in)
    packed = packed.at[R_U:R_U + H].set(params['whh'])
    packed = packed.at[R_BIN].set(b_in[0])
    packed = packed.at[R_WO:R_WO + H].set(wo_pad)
    packed = packed.at[R_BO].set(bo_pad[0])

    # mask[t] = not_dones[t-1] (0 for t == 0): where the LSTM state is reset.
    mask = jnp.concatenate([jnp.zeros((1,), jnp.float32), not_dones[:-1]])

    probs_padded = pl.pallas_call(
        disc_lstm_policy_kernel,
        out_shape=jax.ShapeDtypeStruct((t_steps, LANE), jnp.float32),
        in_specs=[pl.BlockSpec(memory_space=pltpu.MemorySpace.SMEM),
                  pl.BlockSpec(memory_space=pltpu.MemorySpace.VMEM),
                  pl.BlockSpec(memory_space=pltpu.MemorySpace.VMEM)],
        out_specs=pl.BlockSpec(memory_space=pltpu.MemorySpace.VMEM),
    )(mask, x, packed)

    probs = probs_padded[:, :ACTION_DIM]
    return probs, jnp.zeros_like(probs)


def reference_forward(params, x, not_dones):
    """Pure-JAX reference with identical semantics (for validation)."""
    emb = x @ params['we'] + params['be']
    gx = emb @ params['wih'] + params['bias']
    h = jnp.zeros((1, H), jnp.float32)
    c = jnp.zeros((1, H), jnp.float32)
    hs = []
    for t in range(x.shape[0]):
        m = jnp.float32(0.0) if t == 0 else not_dones[t - 1]
        h = h * m
        c = c * m
        g = gx[t:t + 1] + h @ params['whh']
        i_g = jax.nn.sigmoid(g[:, 0 * H:1 * H])
        f_g = jax.nn.sigmoid(g[:, 1 * H:2 * H])
        g_g = jnp.tanh(g[:, 2 * H:3 * H])
        o_g = jax.nn.sigmoid(g[:, 3 * H:4 * H])
        c = f_g * c + i_g * g_g
        h = o_g * jnp.tanh(c)
        hs.append(h)
    hs = jnp.concatenate(hs, axis=0)
    logits = hs @ params['wo'] + params['bo']
    probs = jax.nn.softmax(logits, axis=-1)
    return probs, jnp.zeros_like(probs)


if __name__ == "__main__":
    key = jax.random.PRNGKey(0)
    ks = jax.random.split(key, 8)
    params = {
        'we':   jax.random.normal(ks[0], (STATE_DIM, H0), jnp.float32) * 0.1,
        'be':   jax.random.normal(ks[1], (1, H0), jnp.float32) * 0.1,
        'wih':  jax.random.normal(ks[2], (H0, 4 * H), jnp.float32) * 0.1,
        'whh':  jax.random.normal(ks[3], (H, 4 * H), jnp.float32) * 0.1,
        'bias': jax.random.normal(ks[4], (1, 4 * H), jnp.float32) * 0.1,  # b_ih + b_hh
        'wo':   jax.random.normal(ks[5], (H, ACTION_DIM), jnp.float32) * 0.1,
        'bo':   jax.random.normal(ks[6], (1, ACTION_DIM), jnp.float32) * 0.1,
    }

    x = jax.random.normal(ks[7], (T, STATE_DIM), jnp.float32)
    # Episode boundaries (done at steps 2 and 6) -> LSTM state resets at 3 and 7.
    not_dones = jnp.array([1., 1., 0., 1., 1., 1., 0., 1.], jnp.float32)

    probs, zeros = disc_lstm_policy_forward(params, x, not_dones)
    jax.block_until_ready((probs, zeros))

    ref_probs, ref_zeros = reference_forward(params, x, not_dones)
    assert probs.shape == (T, ACTION_DIM) and zeros.shape == (T, ACTION_DIM)
    assert jnp.allclose(jnp.sum(probs, axis=-1), 1.0, atol=1e-4), "rows not normalized"
    assert jnp.allclose(probs, ref_probs, atol=1e-4, rtol=1e-4), "probs mismatch"
    assert jnp.allclose(zeros, ref_zeros), "zeros mismatch"

    print("KERNEL_OK")
</pallas_src>

<mosaic_0001>
module attributes {stable_mosaic.version = 11 : i64} {
  func.func @disc_lstm_policy_kernel(%arg0: memref<8xf32, #tpu.memory_space<smem>>, %arg1: memref<8x16xf32, #tpu.memory_space<vmem>>, %arg2: memref<96x128xf32, #tpu.memory_space<vmem>>, %arg3: memref<8x128xf32, #tpu.memory_space<vmem>>) attributes {dimension_semantics = [], scalar_prefetch = 0 : i64, scratch_operands = 0 : i64, tpu.core_type = #tpu.core_type<tc>} {
    %c0 = arith.constant 0 : index
    %c0_0 = arith.constant 0 : index
    %0 = vector.load %arg2[%c0, %c0_0] : memref<96x128xf32, #tpu.memory_space<vmem>>, vector<16x128xf32>
    %c16 = arith.constant 16 : index
    %c0_1 = arith.constant 0 : index
    %1 = vector.load %arg2[%c16, %c0_1] : memref<96x128xf32, #tpu.memory_space<vmem>>, vector<32x128xf32>
    %c48 = arith.constant 48 : index
    %c0_2 = arith.constant 0 : index
    %2 = vector.load %arg2[%c48, %c0_2] : memref<96x128xf32, #tpu.memory_space<vmem>>, vector<1x128xf32>
    %c56 = arith.constant 56 : index
    %c0_3 = arith.constant 0 : index
    %3 = vector.load %arg2[%c56, %c0_3] : memref<96x128xf32, #tpu.memory_space<vmem>>, vector<32x128xf32>
    %c88 = arith.constant 88 : index
    %c0_4 = arith.constant 0 : index
    %4 = vector.load %arg2[%c88, %c0_4] : memref<96x128xf32, #tpu.memory_space<vmem>>, vector<1x128xf32>
    %c0_5 = arith.constant 0 : index
    %c0_6 = arith.constant 0 : index
    %5 = vector.load %arg1[%c0_5, %c0_6] : memref<8x16xf32, #tpu.memory_space<vmem>>, vector<8x16xf32>
    %cst = arith.constant dense<0.000000e+00> : vector<8x128xf32>
    %6 = tpu.matmul %5, %0, %cst {dimension_numbers = #tpu.dot_dimension_numbers<[1], [0], [0], [1], [0, 0, 1, 1], [], []>} : vector<8x16xf32>, vector<16x128xf32>, vector<8x128xf32> -> vector<8x128xf32>
    %7 = vector.broadcast %2 : vector<1x128xf32> to vector<8x128xf32>
    %8 = arith.addf %6, %7 : vector<8x128xf32>
    %cst_7 = arith.constant 0.000000e+00 : f32
    %9 = vector.broadcast %cst_7 : f32 to vector<1x32xf32>
    %cst_8 = arith.constant 0.000000e+00 : f32
    %10 = vector.broadcast %cst_8 : f32 to vector<1x32xf32>
    %c0_9 = arith.constant 0 : index
    %11 = memref.load %arg0[%c0_9] : memref<8xf32, #tpu.memory_space<smem>>
    %12 = vector.broadcast %11 : f32 to vector<1x32xf32>
    %13 = arith.mulf %9, %12 : vector<1x32xf32>
    %14 = vector.broadcast %11 : f32 to vector<1x32xf32>
    %15 = arith.mulf %10, %14 : vector<1x32xf32>
    %16 = vector.extract_strided_slice %8 {offsets = [0, 0], sizes = [1, 128], strides = [1, 1]} : vector<8x128xf32> to vector<1x128xf32>
    %cst_10 = arith.constant dense<0.000000e+00> : vector<1x128xf32>
    %17 = tpu.matmul %13, %1, %cst_10 {dimension_numbers = #tpu.dot_dimension_numbers<[1], [0], [0], [1], [0, 0, 1, 1], [], []>} : vector<1x32xf32>, vector<32x128xf32>, vector<1x128xf32> -> vector<1x128xf32>
    %18 = arith.addf %16, %17 : vector<1x128xf32>
    %cst_11 = arith.constant 5.000000e-01 : f32
    %19 = vector.broadcast %cst_11 : f32 to vector<1x128xf32>
    %20 = arith.mulf %19, %18 : vector<1x128xf32>
    %21 = math.tanh %20 : vector<1x128xf32>
    %cst_12 = arith.constant 5.000000e-01 : f32
    %22 = vector.broadcast %cst_12 : f32 to vector<1x128xf32>
    %23 = arith.mulf %22, %21 : vector<1x128xf32>
    %cst_13 = arith.constant 5.000000e-01 : f32
    %24 = vector.broadcast %cst_13 : f32 to vector<1x128xf32>
    %25 = arith.addf %23, %24 : vector<1x128xf32>
    %26 = math.tanh %18 : vector<1x128xf32>
    %27 = vector.extract_strided_slice %25 {offsets = [0, 0], sizes = [1, 32], strides = [1, 1]} : vector<1x128xf32> to vector<1x32xf32>
    %28 = vector.extract_strided_slice %25 {offsets = [0, 32], sizes = [1, 32], strides = [1, 1]} : vector<1x128xf32> to vector<1x32xf32>
    %29 = vector.extract_strided_slice %26 {offsets = [0, 64], sizes = [1, 32], strides = [1, 1]} : vector<1x128xf32> to vector<1x32xf32>
    %30 = vector.extract_strided_slice %25 {offsets = [0, 96], sizes = [1, 32], strides = [1, 1]} : vector<1x128xf32> to vector<1x32xf32>
    %31 = arith.mulf %28, %15 : vector<1x32xf32>
    %32 = arith.mulf %27, %29 : vector<1x32xf32>
    %33 = arith.addf %31, %32 : vector<1x32xf32>
    %34 = math.tanh %33 : vector<1x32xf32>
    %35 = arith.mulf %30, %34 : vector<1x32xf32>
    %c1 = arith.constant 1 : index
    %36 = memref.load %arg0[%c1] : memref<8xf32, #tpu.memory_space<smem>>
    %37 = vector.broadcast %36 : f32 to vector<1x32xf32>
    %38 = arith.mulf %35, %37 : vector<1x32xf32>
    %39 = vector.broadcast %36 : f32 to vector<1x32xf32>
    %40 = arith.mulf %33, %39 : vector<1x32xf32>
    %41 = vector.extract_strided_slice %8 {offsets = [1, 0], sizes = [1, 128], strides = [1, 1]} : vector<8x128xf32> to vector<1x128xf32>
    %cst_14 = arith.constant dense<0.000000e+00> : vector<1x128xf32>
    %42 = tpu.matmul %38, %1, %cst_14 {dimension_numbers = #tpu.dot_dimension_numbers<[1], [0], [0], [1], [0, 0, 1, 1], [], []>} : vector<1x32xf32>, vector<32x128xf32>, vector<1x128xf32> -> vector<1x128xf32>
    %43 = arith.addf %41, %42 : vector<1x128xf32>
    %cst_15 = arith.constant 5.000000e-01 : f32
    %44 = vector.broadcast %cst_15 : f32 to vector<1x128xf32>
    %45 = arith.mulf %44, %43 : vector<1x128xf32>
    %46 = math.tanh %45 : vector<1x128xf32>
    %cst_16 = arith.constant 5.000000e-01 : f32
    %47 = vector.broadcast %cst_16 : f32 to vector<1x128xf32>
    %48 = arith.mulf %47, %46 : vector<1x128xf32>
    %cst_17 = arith.constant 5.000000e-01 : f32
    %49 = vector.broadcast %cst_17 : f32 to vector<1x128xf32>
    %50 = arith.addf %48, %49 : vector<1x128xf32>
    %51 = math.tanh %43 : vector<1x128xf32>
    %52 = vector.extract_strided_slice %50 {offsets = [0, 0], sizes = [1, 32], strides = [1, 1]} : vector<1x128xf32> to vector<1x32xf32>
    %53 = vector.extract_strided_slice %50 {offsets = [0, 32], sizes = [1, 32], strides = [1, 1]} : vector<1x128xf32> to vector<1x32xf32>
    %54 = vector.extract_strided_slice %51 {offsets = [0, 64], sizes = [1, 32], strides = [1, 1]} : vector<1x128xf32> to vector<1x32xf32>
    %55 = vector.extract_strided_slice %50 {offsets = [0, 96], sizes = [1, 32], strides = [1, 1]} : vector<1x128xf32> to vector<1x32xf32>
    %56 = arith.mulf %53, %40 : vector<1x32xf32>
    %57 = arith.mulf %52, %54 : vector<1x32xf32>
    %58 = arith.addf %56, %57 : vector<1x32xf32>
    %59 = math.tanh %58 : vector<1x32xf32>
    %60 = arith.mulf %55, %59 : vector<1x32xf32>
    %c2 = arith.constant 2 : index
    %61 = memref.load %arg0[%c2] : memref<8xf32, #tpu.memory_space<smem>>
    %62 = vector.broadcast %61 : f32 to vector<1x32xf32>
    %63 = arith.mulf %60, %62 : vector<1x32xf32>
    %64 = vector.broadcast %61 : f32 to vector<1x32xf32>
    %65 = arith.mulf %58, %64 : vector<1x32xf32>
    %66 = vector.extract_strided_slice %8 {offsets = [2, 0], sizes = [1, 128], strides = [1, 1]} : vector<8x128xf32> to vector<1x128xf32>
    %cst_18 = arith.constant dense<0.000000e+00> : vector<1x128xf32>
    %67 = tpu.matmul %63, %1, %cst_18 {dimension_numbers = #tpu.dot_dimension_numbers<[1], [0], [0], [1], [0, 0, 1, 1], [], []>} : vector<1x32xf32>, vector<32x128xf32>, vector<1x128xf32> -> vector<1x128xf32>
    %68 = arith.addf %66, %67 : vector<1x128xf32>
    %cst_19 = arith.constant 5.000000e-01 : f32
    %69 = vector.broadcast %cst_19 : f32 to vector<1x128xf32>
    %70 = arith.mulf %69, %68 : vector<1x128xf32>
    %71 = math.tanh %70 : vector<1x128xf32>
    %cst_20 = arith.constant 5.000000e-01 : f32
    %72 = vector.broadcast %cst_20 : f32 to vector<1x128xf32>
    %73 = arith.mulf %72, %71 : vector<1x128xf32>
    %cst_21 = arith.constant 5.000000e-01 : f32
    %74 = vector.broadcast %cst_21 : f32 to vector<1x128xf32>
    %75 = arith.addf %73, %74 : vector<1x128xf32>
    %76 = math.tanh %68 : vector<1x128xf32>
    %77 = vector.extract_strided_slice %75 {offsets = [0, 0], sizes = [1, 32], strides = [1, 1]} : vector<1x128xf32> to vector<1x32xf32>
    %78 = vector.extract_strided_slice %75 {offsets = [0, 32], sizes = [1, 32], strides = [1, 1]} : vector<1x128xf32> to vector<1x32xf32>
    %79 = vector.extract_strided_slice %76 {offsets = [0, 64], sizes = [1, 32], strides = [1, 1]} : vector<1x128xf32> to vector<1x32xf32>
    %80 = vector.extract_strided_slice %75 {offsets = [0, 96], sizes = [1, 32], strides = [1, 1]} : vector<1x128xf32> to vector<1x32xf32>
    %81 = arith.mulf %78, %65 : vector<1x32xf32>
    %82 = arith.mulf %77, %79 : vector<1x32xf32>
    %83 = arith.addf %81, %82 : vector<1x32xf32>
    %84 = math.tanh %83 : vector<1x32xf32>
    %85 = arith.mulf %80, %84 : vector<1x32xf32>
    %c3 = arith.constant 3 : index
    %86 = memref.load %arg0[%c3] : memref<8xf32, #tpu.memory_space<smem>>
    %87 = vector.broadcast %86 : f32 to vector<1x32xf32>
    %88 = arith.mulf %85, %87 : vector<1x32xf32>
    %89 = vector.broadcast %86 : f32 to vector<1x32xf32>
    %90 = arith.mulf %83, %89 : vector<1x32xf32>
    %91 = vector.extract_strided_slice %8 {offsets = [3, 0], sizes = [1, 128], strides = [1, 1]} : vector<8x128xf32> to vector<1x128xf32>
    %cst_22 = arith.constant dense<0.000000e+00> : vector<1x128xf32>
    %92 = tpu.matmul %88, %1, %cst_22 {dimension_numbers = #tpu.dot_dimension_numbers<[1], [0], [0], [1], [0, 0, 1, 1], [], []>} : vector<1x32xf32>, vector<32x128xf32>, vector<1x128xf32> -> vector<1x128xf32>
    %93 = arith.addf %91, %92 : vector<1x128xf32>
    %cst_23 = arith.constant 5.000000e-01 : f32
    %94 = vector.broadcast %cst_23 : f32 to vector<1x128xf32>
    %95 = arith.mulf %94, %93 : vector<1x128xf32>
    %96 = math.tanh %95 : vector<1x128xf32>
    %cst_24 = arith.constant 5.000000e-01 : f32
    %97 = vector.broadcast %cst_24 : f32 to vector<1x128xf32>
    %98 = arith.mulf %97, %96 : vector<1x128xf32>
    %cst_25 = arith.constant 5.000000e-01 : f32
    %99 = vector.broadcast %cst_25 : f32 to vector<1x128xf32>
    %100 = arith.addf %98, %99 : vector<1x128xf32>
    %101 = math.tanh %93 : vector<1x128xf32>
    %102 = vector.extract_strided_slice %100 {offsets = [0, 0], sizes = [1, 32], strides = [1, 1]} : vector<1x128xf32> to vector<1x32xf32>
    %103 = vector.extract_strided_slice %100 {offsets = [0, 32], sizes = [1, 32], strides = [1, 1]} : vector<1x128xf32> to vector<1x32xf32>
    %104 = vector.extract_strided_slice %101 {offsets = [0, 64], sizes = [1, 32], strides = [1, 1]} : vector<1x128xf32> to vector<1x32xf32>
    %105 = vector.extract_strided_slice %100 {offsets = [0, 96], sizes = [1, 32], strides = [1, 1]} : vector<1x128xf32> to vector<1x32xf32>
    %106 = arith.mulf %103, %90 : vector<1x32xf32>
    %107 = arith.mulf %102, %104 : vector<1x32xf32>
    %108 = arith.addf %106, %107 : vector<1x32xf32>
    %109 = math.tanh %108 : vector<1x32xf32>
    %110 = arith.mulf %105, %109 : vector<1x32xf32>
    %c4 = arith.constant 4 : index
    %111 = memref.load %arg0[%c4] : memref<8xf32, #tpu.memory_space<smem>>
    %112 = vector.broadcast %111 : f32 to vector<1x32xf32>
    %113 = arith.mulf %110, %112 : vector<1x32xf32>
    %114 = vector.broadcast %111 : f32 to vector<1x32xf32>
    %115 = arith.mulf %108, %114 : vector<1x32xf32>
    %116 = vector.extract_strided_slice %8 {offsets = [4, 0], sizes = [1, 128], strides = [1, 1]} : vector<8x128xf32> to vector<1x128xf32>
    %cst_26 = arith.constant dense<0.000000e+00> : vector<1x128xf32>
    %117 = tpu.matmul %113, %1, %cst_26 {dimension_numbers = #tpu.dot_dimension_numbers<[1], [0], [0], [1], [0, 0, 1, 1], [], []>} : vector<1x32xf32>, vector<32x128xf32>, vector<1x128xf32> -> vector<1x128xf32>
    %118 = arith.addf %116, %117 : vector<1x128xf32>
    %cst_27 = arith.constant 5.000000e-01 : f32
    %119 = vector.broadcast %cst_27 : f32 to vector<1x128xf32>
    %120 = arith.mulf %119, %118 : vector<1x128xf32>
    %121 = math.tanh %120 : vector<1x128xf32>
    %cst_28 = arith.constant 5.000000e-01 : f32
    %122 = vector.broadcast %cst_28 : f32 to vector<1x128xf32>
    %123 = arith.mulf %122, %121 : vector<1x128xf32>
    %cst_29 = arith.constant 5.000000e-01 : f32
    %124 = vector.broadcast %cst_29 : f32 to vector<1x128xf32>
    %125 = arith.addf %123, %124 : vector<1x128xf32>
    %126 = math.tanh %118 : vector<1x128xf32>
    %127 = vector.extract_strided_slice %125 {offsets = [0, 0], sizes = [1, 32], strides = [1, 1]} : vector<1x128xf32> to vector<1x32xf32>
    %128 = vector.extract_strided_slice %125 {offsets = [0, 32], sizes = [1, 32], strides = [1, 1]} : vector<1x128xf32> to vector<1x32xf32>
    %129 = vector.extract_strided_slice %126 {offsets = [0, 64], sizes = [1, 32], strides = [1, 1]} : vector<1x128xf32> to vector<1x32xf32>
    %130 = vector.extract_strided_slice %125 {offsets = [0, 96], sizes = [1, 32], strides = [1, 1]} : vector<1x128xf32> to vector<1x32xf32>
    %131 = arith.mulf %128, %115 : vector<1x32xf32>
    %132 = arith.mulf %127, %129 : vector<1x32xf32>
    %133 = arith.addf %131, %132 : vector<1x32xf32>
    %134 = math.tanh %133 : vector<1x32xf32>
    %135 = arith.mulf %130, %134 : vector<1x32xf32>
    %c5 = arith.constant 5 : index
    %136 = memref.load %arg0[%c5] : memref<8xf32, #tpu.memory_space<smem>>
    %137 = vector.broadcast %136 : f32 to vector<1x32xf32>
    %138 = arith.mulf %135, %137 : vector<1x32xf32>
    %139 = vector.broadcast %136 : f32 to vector<1x32xf32>
    %140 = arith.mulf %133, %139 : vector<1x32xf32>
    %141 = vector.extract_strided_slice %8 {offsets = [5, 0], sizes = [1, 128], strides = [1, 1]} : vector<8x128xf32> to vector<1x128xf32>
    %cst_30 = arith.constant dense<0.000000e+00> : vector<1x128xf32>
    %142 = tpu.matmul %138, %1, %cst_30 {dimension_numbers = #tpu.dot_dimension_numbers<[1], [0], [0], [1], [0, 0, 1, 1], [], []>} : vector<1x32xf32>, vector<32x128xf32>, vector<1x128xf32> -> vector<1x128xf32>
    %143 = arith.addf %141, %142 : vector<1x128xf32>
    %cst_31 = arith.constant 5.000000e-01 : f32
    %144 = vector.broadcast %cst_31 : f32 to vector<1x128xf32>
    %145 = arith.mulf %144, %143 : vector<1x128xf32>
    %146 = math.tanh %145 : vector<1x128xf32>
    %cst_32 = arith.constant 5.000000e-01 : f32
    %147 = vector.broadcast %cst_32 : f32 to vector<1x128xf32>
    %148 = arith.mulf %147, %146 : vector<1x128xf32>
    %cst_33 = arith.constant 5.000000e-01 : f32
    %149 = vector.broadcast %cst_33 : f32 to vector<1x128xf32>
    %150 = arith.addf %148, %149 : vector<1x128xf32>
    %151 = math.tanh %143 : vector<1x128xf32>
    %152 = vector.extract_strided_slice %150 {offsets = [0, 0], sizes = [1, 32], strides = [1, 1]} : vector<1x128xf32> to vector<1x32xf32>
    %153 = vector.extract_strided_slice %150 {offsets = [0, 32], sizes = [1, 32], strides = [1, 1]} : vector<1x128xf32> to vector<1x32xf32>
    %154 = vector.extract_strided_slice %151 {offsets = [0, 64], sizes = [1, 32], strides = [1, 1]} : vector<1x128xf32> to vector<1x32xf32>
    %155 = vector.extract_strided_slice %150 {offsets = [0, 96], sizes = [1, 32], strides = [1, 1]} : vector<1x128xf32> to vector<1x32xf32>
    %156 = arith.mulf %153, %140 : vector<1x32xf32>
    %157 = arith.mulf %152, %154 : vector<1x32xf32>
    %158 = arith.addf %156, %157 : vector<1x32xf32>
    %159 = math.tanh %158 : vector<1x32xf32>
    %160 = arith.mulf %155, %159 : vector<1x32xf32>
    %c6 = arith.constant 6 : index
    %161 = memref.load %arg0[%c6] : memref<8xf32, #tpu.memory_space<smem>>
    %162 = vector.broadcast %161 : f32 to vector<1x32xf32>
    %163 = arith.mulf %160, %162 : vector<1x32xf32>
    %164 = vector.broadcast %161 : f32 to vector<1x32xf32>
    %165 = arith.mulf %158, %164 : vector<1x32xf32>
    %166 = vector.extract_strided_slice %8 {offsets = [6, 0], sizes = [1, 128], strides = [1, 1]} : vector<8x128xf32> to vector<1x128xf32>
    %cst_34 = arith.constant dense<0.000000e+00> : vector<1x128xf32>
    %167 = tpu.matmul %163, %1, %cst_34 {dimension_numbers = #tpu.dot_dimension_numbers<[1], [0], [0], [1], [0, 0, 1, 1], [], []>} : vector<1x32xf32>, vector<32x128xf32>, vector<1x128xf32> -> vector<1x128xf32>
    %168 = arith.addf %166, %167 : vector<1x128xf32>
    %cst_35 = arith.constant 5.000000e-01 : f32
    %169 = vector.broadcast %cst_35 : f32 to vector<1x128xf32>
    %170 = arith.mulf %169, %168 : vector<1x128xf32>
    %171 = math.tanh %170 : vector<1x128xf32>
    %cst_36 = arith.constant 5.000000e-01 : f32
    %172 = vector.broadcast %cst_36 : f32 to vector<1x128xf32>
    %173 = arith.mulf %172, %171 : vector<1x128xf32>
    %cst_37 = arith.constant 5.000000e-01 : f32
    %174 = vector.broadcast %cst_37 : f32 to vector<1x128xf32>
    %175 = arith.addf %173, %174 : vector<1x128xf32>
    %176 = math.tanh %168 : vector<1x128xf32>
    %177 = vector.extract_strided_slice %175 {offsets = [0, 0], sizes = [1, 32], strides = [1, 1]} : vector<1x128xf32> to vector<1x32xf32>
    %178 = vector.extract_strided_slice %175 {offsets = [0, 32], sizes = [1, 32], strides = [1, 1]} : vector<1x128xf32> to vector<1x32xf32>
    %179 = vector.extract_strided_slice %176 {offsets = [0, 64], sizes = [1, 32], strides = [1, 1]} : vector<1x128xf32> to vector<1x32xf32>
    %180 = vector.extract_strided_slice %175 {offsets = [0, 96], sizes = [1, 32], strides = [1, 1]} : vector<1x128xf32> to vector<1x32xf32>
    %181 = arith.mulf %178, %165 : vector<1x32xf32>
    %182 = arith.mulf %177, %179 : vector<1x32xf32>
    %183 = arith.addf %181, %182 : vector<1x32xf32>
    %184 = math.tanh %183 : vector<1x32xf32>
    %185 = arith.mulf %180, %184 : vector<1x32xf32>
    %c7 = arith.constant 7 : index
    %186 = memref.load %arg0[%c7] : memref<8xf32, #tpu.memory_space<smem>>
    %187 = vector.broadcast %186 : f32 to vector<1x32xf32>
    %188 = arith.mulf %185, %187 : vector<1x32xf32>
    %189 = vector.broadcast %186 : f32 to vector<1x32xf32>
    %190 = arith.mulf %183, %189 : vector<1x32xf32>
    %191 = vector.extract_strided_slice %8 {offsets = [7, 0], sizes = [1, 128], strides = [1, 1]} : vector<8x128xf32> to vector<1x128xf32>
    %cst_38 = arith.constant dense<0.000000e+00> : vector<1x128xf32>
    %192 = tpu.matmul %188, %1, %cst_38 {dimension_numbers = #tpu.dot_dimension_numbers<[1], [0], [0], [1], [0, 0, 1, 1], [], []>} : vector<1x32xf32>, vector<32x128xf32>, vector<1x128xf32> -> vector<1x128xf32>
    %193 = arith.addf %191, %192 : vector<1x128xf32>
    %cst_39 = arith.constant 5.000000e-01 : f32
    %194 = vector.broadcast %cst_39 : f32 to vector<1x128xf32>
    %195 = arith.mulf %194, %193 : vector<1x128xf32>
    %196 = math.tanh %195 : vector<1x128xf32>
    %cst_40 = arith.constant 5.000000e-01 : f32
    %197 = vector.broadcast %cst_40 : f32 to vector<1x128xf32>
    %198 = arith.mulf %197, %196 : vector<1x128xf32>
    %cst_41 = arith.constant 5.000000e-01 : f32
    %199 = vector.broadcast %cst_41 : f32 to vector<1x128xf32>
    %200 = arith.addf %198, %199 : vector<1x128xf32>
    %201 = math.tanh %193 : vector<1x128xf32>
    %202 = vector.extract_strided_slice %200 {offsets = [0, 0], sizes = [1, 32], strides = [1, 1]} : vector<1x128xf32> to vector<1x32xf32>
    %203 = vector.extract_strided_slice %200 {offsets = [0, 32], sizes = [1, 32], strides = [1, 1]} : vector<1x128xf32> to vector<1x32xf32>
    %204 = vector.extract_strided_slice %201 {offsets = [0, 64], sizes = [1, 32], strides = [1, 1]} : vector<1x128xf32> to vector<1x32xf32>
    %205 = vector.extract_strided_slice %200 {offsets = [0, 96], sizes = [1, 32], strides = [1, 1]} : vector<1x128xf32> to vector<1x32xf32>
    %206 = arith.mulf %203, %190 : vector<1x32xf32>
    %207 = arith.mulf %202, %204 : vector<1x32xf32>
    %208 = arith.addf %206, %207 : vector<1x32xf32>
    %209 = math.tanh %208 : vector<1x32xf32>
    %210 = arith.mulf %205, %209 : vector<1x32xf32>
    %211 = tpu.concatenate %35, %60, %85, %110, %135, %160, %185, %210 in 0 : vector<1x32xf32>, vector<1x32xf32>, vector<1x32xf32>, vector<1x32xf32>, vector<1x32xf32>, vector<1x32xf32>, vector<1x32xf32>, vector<1x32xf32> -> vector<8x32xf32>
    %cst_42 = arith.constant dense<0.000000e+00> : vector<8x128xf32>
    %212 = tpu.matmul %211, %3, %cst_42 {dimension_numbers = #tpu.dot_dimension_numbers<[1], [0], [0], [1], [0, 0, 1, 1], [], []>} : vector<8x32xf32>, vector<32x128xf32>, vector<8x128xf32> -> vector<8x128xf32>
    %213 = vector.broadcast %4 : vector<1x128xf32> to vector<8x128xf32>
    %214 = arith.addf %212, %213 : vector<8x128xf32>
    %cst_43 = arith.constant dense<0xFF800000> : vector<8xf32>
    %215 = vector.multi_reduction <maximumf>, %214, %cst_43 [1] : vector<8x128xf32> to vector<8xf32>
    %216 = vector.shape_cast %215 : vector<8xf32> to vector<8x1xf32>
    %217 = vector.broadcast %216 : vector<8x1xf32> to vector<8x128xf32>
    %218 = arith.subf %214, %217 : vector<8x128xf32>
    %219 = math.exp %218 : vector<8x128xf32>
    %cst_44 = arith.constant dense<0.000000e+00> : vector<8xf32>
    %220 = vector.multi_reduction <add>, %219, %cst_44 [1] : vector<8x128xf32> to vector<8xf32>
    %221 = vector.shape_cast %220 : vector<8xf32> to vector<8x1xf32>
    %222 = vector.broadcast %221 : vector<8x1xf32> to vector<8x128xf32>
    %223 = arith.divf %219, %222 : vector<8x128xf32>
    %c0_45 = arith.constant 0 : index
    %c0_46 = arith.constant 0 : index
    %224 = vector.load %arg3[%c0_45, %c0_46] : memref<8x128xf32, #tpu.memory_space<vmem>>, vector<8x128xf32>
    tpu.vector_store %arg3[%c0_45, %c0_46], %223 {strides = array<i32>} : memref<8x128xf32, #tpu.memory_space<vmem>>, vector<8x128xf32>,
    return
  }
}

</mosaic_0001>

<llo_original>
// kernel: tpu_custom_call.1
$region0: #{tpu_custom_call.1}
  #allocation0 [shape = 'u32[]', space=smem, size = 0x4, offset = 0x4, fixed_abs, tag = 'smem constant byte address 0x4 - core index']
  #allocation1 [shape = 'u32[144,128]{1,0:T(1,128)}', space=vmem, size = 0x12000, scoped, tag = 'internal scratch']
  %s0 = inlined_call_operand.hbm [shape: f32[8], index: 0, kind: input, shape index: {}]
  %s1 = inlined_call_operand.hbm [shape: f32[8,16], index: 1, kind: input, shape index: {}]
  %s2 = inlined_call_operand.hbm [shape: f32[96,128], index: 2, kind: input, shape index: {}]
  %s3 = inlined_call_operand.hbm [shape: f32[8,128], index: 3, kind: output, shape index: {}]
  %s4 = sld [smem:[#allocation0]]
  $region34: #{tpu_custom_call.1} parent=0
    _
  %s6 = ssub.s32 1, %s4
  %s7 = scalar_select 0, %s6, %s4
  $region1: #{tpu_custom_call.1} parent=0
    #allocation2 [shape = 'u8[512]{0}', space=smem, size = 0x200, scoped, tag = 'input window, operand 0, single buffered']
    #allocation3 [shape = 's32[1]{0}', space=sflag, size = 0x4, scoped, tag = 'scoped memory for tpu_custom_call.1']
    #allocation4 [shape = 's32[1]{0}', space=sflag, size = 0x4, scoped, tag = 'scoped memory for tpu_custom_call.1']
    #allocation5 [shape = 's32[1]{0}', space=sflag, size = 0x4, scoped, tag = 'scoped memory for tpu_custom_call.1']
    #allocation6 [shape = 'u8[4096]{0}', space=vmem, size = 0x1000, scoped, tag = 'input window, operand 1, single buffered']
    #allocation7 [shape = 'u8[49152]{0}', space=vmem, size = 0xc000, scoped, tag = 'input window, operand 2, single buffered']
    #allocation8 [shape = 's32[1]{0}', space=sflag, size = 0x4, scoped, tag = 'scoped memory for tpu_custom_call.1']
    #allocation9 [shape = 'u8[4096]{0}', space=vmem, size = 0x1000, scoped, tag = 'output window, operand 0, single buffered']
    %8 = vsyncpa [#allocation5], 0
    %9 = vsyncpa [#allocation3], 0
    %10 = vsyncpa [#allocation8], 0
    %11 = vsyncpa [#allocation4], 0
    // Predicated region
    $region2: #{tpu_custom_call.1} parent=1 // pred_check
      _
    $region3: #{tpu_custom_call.1} parent=1 // pred_check_branch
      %13 = sbr.rel (0) target = $region5
    $region4: #{tpu_custom_call.1} parent=1 // pred_region
      %s15 = ssub.s32 16, 16
      %16 = vsyncadd [#allocation5], %s15
      %19 = dma.hbm_to_smem %s0, 16, [#allocation2], [#allocation5]
    $region5: #{tpu_custom_call.1} parent=1 // pred_fallthru
      _
    // Predicated region
    $region6: #{tpu_custom_call.1} parent=1 // pred_check
      _
    $region7: #{tpu_custom_call.1} parent=1 // pred_check_branch
      %21 = sbr.rel (0) target = $region9
    $region8: #{tpu_custom_call.1} parent=1 // pred_region
      %s23 = ssub.s32 128, 128
      %24 = vsyncadd [#allocation3], %s23
      %s26 = sshll.u32 [#allocation6], 4
      %s27 = int_to_ptr.vmem [resolvable:$true] %s26
      %29 = dma.hbm_to_vmem [thread:$0]  %s1, 128, %s27, [#allocation3]
    $region9: #{tpu_custom_call.1} parent=1 // pred_fallthru
      _
    // Predicated region
    $region10: #{tpu_custom_call.1} parent=1 // pred_check
      _
    $region11: #{tpu_custom_call.1} parent=1 // pred_check_branch
      %31 = sbr.rel (0) target = $region13
    $region12: #{tpu_custom_call.1} parent=1 // pred_region
      %s33 = ssub.s32 1536, 1536
      %34 = vsyncadd [#allocation8], %s33
      %s35 = sshll.u32 [#allocation7], 4
      %s36 = int_to_ptr.vmem [resolvable:$true] %s35
      %41 = dma.hbm_to_vmem [thread:$0]  %s2, 1536, %s36, [#allocation8], 128, 128, 8
    $region13: #{tpu_custom_call.1} parent=1 // pred_fallthru
      _
    // Predicated region
    $region14: #{tpu_custom_call.1} parent=1 // pred_check
      _
    $region15: #{tpu_custom_call.1} parent=1 // pred_check_branch
      %43 = sbr.rel (0) target = $region17
    $region16: #{tpu_custom_call.1} parent=1 // pred_region
      %44 = dma.done [#allocation5], 16
    $region17: #{tpu_custom_call.1} parent=1 // pred_fallthru
      _
    // Predicated region
    $region18: #{tpu_custom_call.1} parent=1 // pred_check
      _
    $region19: #{tpu_custom_call.1} parent=1 // pred_check_branch
      %46 = sbr.rel (0) target = $region21
    $region20: #{tpu_custom_call.1} parent=1 // pred_region
      %47 = dma.done [#allocation3], 128
    $region21: #{tpu_custom_call.1} parent=1 // pred_fallthru
      _
    // Predicated region
    $region22: #{tpu_custom_call.1} parent=1 // pred_check
      _
    $region23: #{tpu_custom_call.1} parent=1 // pred_check_branch
      %49 = sbr.rel (0) target = $region25
    $region24: #{tpu_custom_call.1} parent=1 // pred_region
      %50 = dma.done [#allocation8], 1536
    $region25: #{tpu_custom_call.1} parent=1 // pred_fallthru
      _
    %51 = sfence
    %v52 = vld [vmem:[#allocation7] sm:$0xff]
    %v53 = vld [vmem:[#allocation7 + $0x8] sm:$0xff]
    %v54 = vld [vmem:[#allocation7 + $0x10] sm:$0xff]
    %v55 = vld [vmem:[#allocation7 + $0x18] sm:$0xff]
    %v56 = vld [vmem:[#allocation7 + $0x20] sm:$0xff]
    %v57 = vld [vmem:[#allocation7 + $0x28] sm:$0xff]
    %v58 = vld [vmem:[#allocation7 + $0x30] sm:$0x1]
    %v59 = vld [vmem:[#allocation7 + $0x38] sm:$0xff]
    %v60 = vld [vmem:[#allocation7 + $0x40] sm:$0xff]
    %v61 = vld [vmem:[#allocation7 + $0x48] sm:$0xff]
    %v62 = vld [vmem:[#allocation7 + $0x50] sm:$0xff]
    %v63 = vld [vmem:[#allocation7 + $0x58] sm:$0x1]
    %v64 = vld [vmem:[#allocation6] sm:$0xff]
    %v65 = vlaneseq
    %v66 = vshrl.u32 %v65, 7
    %v67 = vsub.s32 0, %v66
    %v68 = vrot.slane %v58, %v67
    %vm69 = vcmask 130048
    %v71 = vsel %vm69, %v64, 0
    %73 = vmatprep.subr.mxu0 0.0
    %74 = vmatpush1.msra.mxu0 %v52
    %75 = vmatprep.subr.mxu0 0.0
    %76 = vmatpush1.msra.mxu0 %v53
    %77 = vmatprep.subr.mxu0 0.0
    %78 = vmatpush1.msra.mxu0 0.0
    %79 = vmatprep.subr.mxu0 0.0
    %80 = vmatpush1.msra.mxu0 0.0
    %81 = vmatprep.subr.mxu0 0.0
    %82 = vmatpush1.msra.mxu0 0.0
    %83 = vmatprep.subr.mxu0 0.0
    %84 = vmatpush1.msra.mxu0 0.0
    %85 = vmatprep.subr.mxu0 0.0
    %86 = vmatpush1.msra.mxu0 0.0
    %87 = vmatprep.subr.mxu0 0.0
    %88 = vmatpush1.msra.mxu0 0.0
    %89 = vmatprep.subr.mxu0 0.0
    %90 = vmatpush1.msra.mxu0 0.0
    %91 = vmatprep.subr.mxu0 0.0
    %92 = vmatpush1.msra.mxu0 0.0
    %93 = vmatprep.subr.mxu0 0.0
    %94 = vmatpush1.msra.mxu0 0.0
    %95 = vmatprep.subr.mxu0 0.0
    %96 = vmatpush1.msra.mxu0 0.0
    %97 = vmatprep.subr.mxu0 0.0
    %98 = vmatpush1.msra.mxu0 0.0
    %99 = vmatprep.subr.mxu0 0.0
    %100 = vmatpush1.msra.mxu0 0.0
    %101 = vmatprep.subr.mxu0 0.0
    %102 = vmatpush1.msra.mxu0 0.0
    %103 = vmatprep.subr.mxu0 0.0
    %104 = vmatpush1.msra.mxu0 0.0
    %105 = vmatprep.subr.mxu0 0.0
    %106 = vmatpush1.msra.mxu0 0.0
    %107 = vmatprep.subr.mxu0 0.0
    %108 = vmatpush1.msra.mxu0 0.0
    %109 = vmatprep.subr.mxu0 0.0
    %110 = vmatpush1.msra.mxu0 0.0
    %111 = vmatprep.subr.mxu0 0.0
    %112 = vmatpush1.msra.mxu0 0.0
    %113 = vmatprep.subr.mxu0 0.0
    %114 = vmatpush1.msra.mxu0 0.0
    %115 = vmatprep.subr.mxu0 0.0
    %116 = vmatpush1.msra.mxu0 0.0
    %117 = vmatprep.subr.mxu0 0.0
    %118 = vmatpush1.msra.mxu0 0.0
    %119 = vmatprep.subr.mxu0 0.0
    %120 = vmatpush1.msra.mxu0 0.0
    %121 = vmatprep.subr.mxu0 0.0
    %122 = vmatpush1.msra.mxu0 0.0
    %123 = vmatprep.subr.mxu0 0.0
    %124 = vmatpush1.msra.mxu0 0.0
    %125 = vmatprep.subr.mxu0 0.0
    %126 = vmatpush1.msra.mxu0 0.0
    %127 = vmatprep.subr.mxu0 0.0
    %128 = vmatpush1.msra.mxu0 0.0
    %129 = vmatprep.subr.mxu0 0.0
    %130 = vmatpush1.msra.mxu0 0.0
    %131 = vmatprep.subr.mxu0 0.0
    %132 = vmatpush1.msra.mxu0 0.0
    %133 = vmatprep.subr.mxu0 0.0
    %134 = vmatpush1.msra.mxu0 0.0
    %135 = vmatprep.subr.mxu0 0.0
    %136 = vmatpush1.msra.mxu0 0.0
    %137 = vmatprep.mubr.f32.mxu0 0.0
    %138 = vmatmul.mubr.f32.gmra.mrb[0].mxu0 %v71
    %v139 = vpop.f32.mrb[0].mxu0
    %v140 = vadd.f32 %v68, %v139
    %v141 = vpop.f32.mrb[0].mxu0
    %142 = vdwg.mxu0
    %s143 = sld [smem:[#allocation2]]
    %v144 = vstv %s143
    %v145 = vmul.f32 %v144, 0.0
    %vm146 = vcmask 261120
    %v148 = vsel %vm146, %v145, 0
    %150 = vmatprep.subr.mxu0 0.0
    %151 = vmatpush1.msra.mxu0 %v54
    %152 = vmatprep.subr.mxu0 0.0
    %153 = vmatpush1.msra.mxu0 %v55
    %154 = vmatprep.subr.mxu0 0.0
    %155 = vmatpush1.msra.mxu0 %v56
    %156 = vmatprep.subr.mxu0 0.0
    %157 = vmatpush1.msra.mxu0 %v57
    %158 = vmatprep.subr.mxu0 0.0
    %159 = vmatpush1.msra.mxu0 0.0
    %160 = vmatprep.subr.mxu0 0.0
    %161 = vmatpush1.msra.mxu0 0.0
    %162 = vmatprep.subr.mxu0 0.0
    %163 = vmatpush1.msra.mxu0 0.0
    %164 = vmatprep.subr.mxu0 0.0
    %165 = vmatpush1.msra.mxu0 0.0
    %166 = vmatprep.subr.mxu0 0.0
    %167 = vmatpush1.msra.mxu0 0.0
    %168 = vmatprep.subr.mxu0 0.0
    %169 = vmatpush1.msra.mxu0 0.0
    %170 = vmatprep.subr.mxu0 0.0
    %171 = vmatpush1.msra.mxu0 0.0
    %172 = vmatprep.subr.mxu0 0.0
    %173 = vmatpush1.msra.mxu0 0.0
    %174 = vmatprep.subr.mxu0 0.0
    %175 = vmatpush1.msra.mxu0 0.0
    %176 = vmatprep.subr.mxu0 0.0
    %177 = vmatpush1.msra.mxu0 0.0
    %178 = vmatprep.subr.mxu0 0.0
    %179 = vmatpush1.msra.mxu0 0.0
    %180 = vmatprep.subr.mxu0 0.0
    %181 = vmatpush1.msra.mxu0 0.0
    %182 = vmatprep.subr.mxu0 0.0
    %183 = vmatpush1.msra.mxu0 0.0
    %184 = vmatprep.subr.mxu0 0.0
    %185 = vmatpush1.msra.mxu0 0.0
    %186 = vmatprep.subr.mxu0 0.0
    %187 = vmatpush1.msra.mxu0 0.0
    %188 = vmatprep.subr.mxu0 0.0
    %189 = vmatpush1.msra.mxu0 0.0
    %190 = vmatprep.subr.mxu0 0.0
    %191 = vmatpush1.msra.mxu0 0.0
    %192 = vmatprep.subr.mxu0 0.0
    %193 = vmatpush1.msra.mxu0 0.0
    %194 = vmatprep.subr.mxu0 0.0
    %195 = vmatpush1.msra.mxu0 0.0
    %196 = vmatprep.subr.mxu0 0.0
    %197 = vmatpush1.msra.mxu0 0.0
    %198 = vmatprep.subr.mxu0 0.0
    %199 = vmatpush1.msra.mxu0 0.0
    %200 = vmatprep.subr.mxu0 0.0
    %201 = vmatpush1.msra.mxu0 0.0
    %202 = vmatprep.subr.mxu0 0.0
    %203 = vmatpush1.msra.mxu0 0.0
    %204 = vmatprep.subr.mxu0 0.0
    %205 = vmatpush1.msra.mxu0 0.0
    %206 = vmatprep.subr.mxu0 0.0
    %207 = vmatpush1.msra.mxu0 0.0
    %208 = vmatprep.subr.mxu0 0.0
    %209 = vmatpush1.msra.mxu0 0.0
    %210 = vmatprep.subr.mxu0 0.0
    %211 = vmatpush1.msra.mxu0 0.0
    %212 = vmatprep.subr.mxu0 0.0
    %213 = vmatpush1.msra.mxu0 0.0
    %214 = vmatprep.mubr.f32.mxu0 0.0
    %215 = vmatmul.mubr.f32.gmra.mrb[0].mxu0 %v148
    %v216 = vpop.f32.mrb[0].mxu0
    %v217 = vadd.f32 0.0, %v216
    %v218 = vpop.f32.mrb[0].mxu0
    %219 = vdwg.mxu0
    %v220 = vadd.f32 %v140, %v217
    %v221 = vmul.f32 %v220, 0.5
    %v222 = vtanh.pop %v221
    %v223 = vmul.f32 %v222, 0.5
    %v224 = vadd.f32 %v223, 0.5
    %v225 = vtanh.pop %v220
    %v226 = vmul.f32 %v224, %v145
    %228 = vrot.lane.b32.xlu0 %v225, 64
    %v229 = vpop.permute.xlu0 %228
    %v231 = vmul.f32 %v224, %v229
    %233 = vrot.lane.b32.xlu0 %v231, 32
    %v234 = vpop.permute.xlu0 %233
    %v236 = vadd.f32 %v226, %v234
    %v237 = vtanh.pop %v236
    %239 = vrot.lane.b32.xlu0 %v237, 64
    %v240 = vpop.permute.xlu0 %239
    %v242 = vmul.f32 %v224, %v240
    %s243 = sld [smem:[#allocation2 + $0x1]]
    %v244 = vstv %s243
    %v245 = vmul.f32 %v242, %v244
    %v246 = vmul.f32 %v236, %v244
    %248 = vrot.lane.b32.xlu0 %v245, 32
    %v249 = vpop.permute.xlu0 %248
    %v250 = vsel %vm146, %v249, 0
    %252 = vmatprep.subr.mxu0 0.0
    %253 = vmatpush1.msra.mxu0 %v54
    %254 = vmatprep.subr.mxu0 0.0
    %255 = vmatpush1.msra.mxu0 %v55
    %256 = vmatprep.subr.mxu0 0.0
    %257 = vmatpush1.msra.mxu0 %v56
    %258 = vmatprep.subr.mxu0 0.0
    %259 = vmatpush1.msra.mxu0 %v57
    %260 = vmatprep.subr.mxu0 0.0
    %261 = vmatpush1.msra.mxu0 0.0
    %262 = vmatprep.subr.mxu0 0.0
    %263 = vmatpush1.msra.mxu0 0.0
    %264 = vmatprep.subr.mxu0 0.0
    %265 = vmatpush1.msra.mxu0 0.0
    %266 = vmatprep.subr.mxu0 0.0
    %267 = vmatpush1.msra.mxu0 0.0
    %268 = vmatprep.subr.mxu0 0.0
    %269 = vmatpush1.msra.mxu0 0.0
    %270 = vmatprep.subr.mxu0 0.0
    %271 = vmatpush1.msra.mxu0 0.0
    %272 = vmatprep.subr.mxu0 0.0
    %273 = vmatpush1.msra.mxu0 0.0
    %274 = vmatprep.subr.mxu0 0.0
    %275 = vmatpush1.msra.mxu0 0.0
    %276 = vmatprep.subr.mxu0 0.0
    %277 = vmatpush1.msra.mxu0 0.0
    %278 = vmatprep.subr.mxu0 0.0
    %279 = vmatpush1.msra.mxu0 0.0
    %280 = vmatprep.subr.mxu0 0.0
    %281 = vmatpush1.msra.mxu0 0.0
    %282 = vmatprep.subr.mxu0 0.0
    %283 = vmatpush1.msra.mxu0 0.0
    %284 = vmatprep.subr.mxu0 0.0
    %285 = vmatpush1.msra.mxu0 0.0
    %286 = vmatprep.subr.mxu0 0.0
    %287 = vmatpush1.msra.mxu0 0.0
    %288 = vmatprep.subr.mxu0 0.0
    %289 = vmatpush1.msra.mxu0 0.0
    %290 = vmatprep.subr.mxu0 0.0
    %291 = vmatpush1.msra.mxu0 0.0
    %292 = vmatprep.subr.mxu0 0.0
    %293 = vmatpush1.msra.mxu0 0.0
    %294 = vmatprep.subr.mxu0 0.0
    %295 = vmatpush1.msra.mxu0 0.0
    %296 = vmatprep.subr.mxu0 0.0
    %297 = vmatpush1.msra.mxu0 0.0
    %298 = vmatprep.subr.mxu0 0.0
    %299 = vmatpush1.msra.mxu0 0.0
    %300 = vmatprep.subr.mxu0 0.0
    %301 = vmatpush1.msra.mxu0 0.0
    %302 = vmatprep.subr.mxu0 0.0
    %303 = vmatpush1.msra.mxu0 0.0
    %304 = vmatprep.subr.mxu0 0.0
    %305 = vmatpush1.msra.mxu0 0.0
    %306 = vmatprep.subr.mxu0 0.0
    %307 = vmatpush1.msra.mxu0 0.0
    %308 = vmatprep.subr.mxu0 0.0
    %309 = vmatpush1.msra.mxu0 0.0
    %310 = vmatprep.subr.mxu0 0.0
    %311 = vmatpush1.msra.mxu0 0.0
    %312 = vmatprep.subr.mxu0 0.0
    %313 = vmatpush1.msra.mxu0 0.0
    %314 = vmatprep.subr.mxu0 0.0
    %315 = vmatpush1.msra.mxu0 0.0
    %316 = vmatprep.mubr.f32.mxu0 0.0
    %317 = vmatmul.mubr.f32.gmra.mrb[0].mxu0 %v250
    %v318 = vpop.f32.mrb[0].mxu0
    %v319 = vadd.f32 0.0, %v318
    %v320 = vpop.f32.mrb[0].mxu0
    %321 = vdwg.mxu0
    %v323 = vrot.slane %v319, 7
    %v325 = vadd.f32 %v140, %v323
    %v326 = vmul.f32 %v325, 0.5
    %v327 = vtanh.pop %v326
    %v328 = vmul.f32 %v327, 0.5
    %v329 = vadd.f32 %v328, 0.5
    %v330 = vtanh.pop %v325
    %v332 = vrot.slane %v246, 7
    %v334 = vmul.f32 %v329, %v332
    %336 = vrot.lane.b32.xlu0 %v330, 64
    %v337 = vpop.permute.xlu0 %336
    %v339 = vmul.f32 %v329, %v337
    %341 = vrot.lane.b32.xlu0 %v339, 32
    %v342 = vpop.permute.xlu0 %341
    %v344 = vadd.f32 %v334, %v342
    %v345 = vtanh.pop %v344
    %347 = vrot.lane.b32.xlu0 %v345, 64
    %v348 = vpop.permute.xlu0 %347
    %v350 = vmul.f32 %v329, %v348
    %s351 = sld [smem:[#allocation2 + $0x2]]
    %v352 = vstv %s351
    %v353 = vmul.f32 %v350, %v352
    %v354 = vmul.f32 %v344, %v352
    %v356 = vrot.slane %v353, 1
    %357 = vrot.lane.b32.xlu0 %v356, 32
    %v358 = vpop.permute.xlu0 %357
    %v359 = vsel %vm146, %v358, 0
    %361 = vmatprep.subr.mxu0 0.0
    %362 = vmatpush1.msra.mxu0 %v54
    %363 = vmatprep.subr.mxu0 0.0
    %364 = vmatpush1.msra.mxu0 %v55
    %365 = vmatprep.subr.mxu0 0.0
    %366 = vmatpush1.msra.mxu0 %v56
    %367 = vmatprep.subr.mxu0 0.0
    %368 = vmatpush1.msra.mxu0 %v57
    %369 = vmatprep.subr.mxu0 0.0
    %370 = vmatpush1.msra.mxu0 0.0
    %371 = vmatprep.subr.mxu0 0.0
    %372 = vmatpush1.msra.mxu0 0.0
    %373 = vmatprep.subr.mxu0 0.0
    %374 = vmatpush1.msra.mxu0 0.0
    %375 = vmatprep.subr.mxu0 0.0
    %376 = vmatpush1.msra.mxu0 0.0
    %377 = vmatprep.subr.mxu0 0.0
    %378 = vmatpush1.msra.mxu0 0.0
    %379 = vmatprep.subr.mxu0 0.0
    %380 = vmatpush1.msra.mxu0 0.0
    %381 = vmatprep.subr.mxu0 0.0
    %382 = vmatpush1.msra.mxu0 0.0
    %383 = vmatprep.subr.mxu0 0.0
    %384 = vmatpush1.msra.mxu0 0.0
    %385 = vmatprep.subr.mxu0 0.0
    %386 = vmatpush1.msra.mxu0 0.0
    %387 = vmatprep.subr.mxu0 0.0
    %388 = vmatpush1.msra.mxu0 0.0
    %389 = vmatprep.subr.mxu0 0.0
    %390 = vmatpush1.msra.mxu0 0.0
    %391 = vmatprep.subr.mxu0 0.0
    %392 = vmatpush1.msra.mxu0 0.0
    %393 = vmatprep.subr.mxu0 0.0
    %394 = vmatpush1.msra.mxu0 0.0
    %395 = vmatprep.subr.mxu0 0.0
    %396 = vmatpush1.msra.mxu0 0.0
    %397 = vmatprep.subr.mxu0 0.0
    %398 = vmatpush1.msra.mxu0 0.0
    %399 = vmatprep.subr.mxu0 0.0
    %400 = vmatpush1.msra.mxu0 0.0
    %401 = vmatprep.subr.mxu0 0.0
    %402 = vmatpush1.msra.mxu0 0.0
    %403 = vmatprep.subr.mxu0 0.0
    %404 = vmatpush1.msra.mxu0 0.0
    %405 = vmatprep.subr.mxu0 0.0
    %406 = vmatpush1.msra.mxu0 0.0
    %407 = vmatprep.subr.mxu0 0.0
    %408 = vmatpush1.msra.mxu0 0.0
    %409 = vmatprep.subr.mxu0 0.0
    %410 = vmatpush1.msra.mxu0 0.0
    %411 = vmatprep.subr.mxu0 0.0
    %412 = vmatpush1.msra.mxu0 0.0
    %413 = vmatprep.subr.mxu0 0.0
    %414 = vmatpush1.msra.mxu0 0.0
    %415 = vmatprep.subr.mxu0 0.0
    %416 = vmatpush1.msra.mxu0 0.0
    %417 = vmatprep.subr.mxu0 0.0
    %418 = vmatpush1.msra.mxu0 0.0
    %419 = vmatprep.subr.mxu0 0.0
    %420 = vmatpush1.msra.mxu0 0.0
    %421 = vmatprep.subr.mxu0 0.0
    %422 = vmatpush1.msra.mxu0 0.0
    %423 = vmatprep.subr.mxu0 0.0
    %424 = vmatpush1.msra.mxu0 0.0
    %425 = vmatprep.mubr.f32.mxu0 0.0
    %426 = vmatmul.mubr.f32.gmra.mrb[0].mxu0 %v359
    %v427 = vpop.f32.mrb[0].mxu0
    %v428 = vadd.f32 0.0, %v427
    %v429 = vpop.f32.mrb[0].mxu0
    %430 = vdwg.mxu0
    %v432 = vrot.slane %v428, 6
    %v434 = vadd.f32 %v140, %v432
    %v435 = vmul.f32 %v434, 0.5
    %v436 = vtanh.pop %v435
    %v437 = vmul.f32 %v436, 0.5
    %v438 = vadd.f32 %v437, 0.5
    %v439 = vtanh.pop %v434
    %v441 = vrot.slane %v354, 7
    %v443 = vmul.f32 %v438, %v441
    %445 = vrot.lane.b32.xlu0 %v439, 64
    %v446 = vpop.permute.xlu0 %445
    %v448 = vmul.f32 %v438, %v446
    %450 = vrot.lane.b32.xlu0 %v448, 32
    %v451 = vpop.permute.xlu0 %450
    %v453 = vadd.f32 %v443, %v451
    %v454 = vtanh.pop %v453
    %456 = vrot.lane.b32.xlu0 %v454, 64
    %v457 = vpop.permute.xlu0 %456
    %v459 = vmul.f32 %v438, %v457
    %s460 = sld [smem:[#allocation2 + $0x3]]
    %v461 = vstv %s460
    %v462 = vmul.f32 %v459, %v461
    %v463 = vmul.f32 %v453, %v461
    %v465 = vrot.slane %v462, 2
    %466 = vrot.lane.b32.xlu0 %v465, 32
    %v467 = vpop.permute.xlu0 %466
    %v468 = vsel %vm146, %v467, 0
    %470 = vmatprep.subr.mxu0 0.0
    %471 = vmatpush1.msra.mxu0 %v54
    %472 = vmatprep.subr.mxu0 0.0
    %473 = vmatpush1.msra.mxu0 %v55
    %474 = vmatprep.subr.mxu0 0.0
    %475 = vmatpush1.msra.mxu0 %v56
    %476 = vmatprep.subr.mxu0 0.0
    %477 = vmatpush1.msra.mxu0 %v57
    %478 = vmatprep.subr.mxu0 0.0
    %479 = vmatpush1.msra.mxu0 0.0
    %480 = vmatprep.subr.mxu0 0.0
    %481 = vmatpush1.msra.mxu0 0.0
    %482 = vmatprep.subr.mxu0 0.0
    %483 = vmatpush1.msra.mxu0 0.0
    %484 = vmatprep.subr.mxu0 0.0
    %485 = vmatpush1.msra.mxu0 0.0
    %486 = vmatprep.subr.mxu0 0.0
    %487 = vmatpush1.msra.mxu0 0.0
    %488 = vmatprep.subr.mxu0 0.0
    %489 = vmatpush1.msra.mxu0 0.0
    %490 = vmatprep.subr.mxu0 0.0
    %491 = vmatpush1.msra.mxu0 0.0
    %492 = vmatprep.subr.mxu0 0.0
    %493 = vmatpush1.msra.mxu0 0.0
    %494 = vmatprep.subr.mxu0 0.0
    %495 = vmatpush1.msra.mxu0 0.0
    %496 = vmatprep.subr.mxu0 0.0
    %497 = vmatpush1.msra.mxu0 0.0
    %498 = vmatprep.subr.mxu0 0.0
    %499 = vmatpush1.msra.mxu0 0.0
    %500 = vmatprep.subr.mxu0 0.0
    %501 = vmatpush1.msra.mxu0 0.0
    %502 = vmatprep.subr.mxu0 0.0
    %503 = vmatpush1.msra.mxu0 0.0
    %504 = vmatprep.subr.mxu0 0.0
    %505 = vmatpush1.msra.mxu0 0.0
    %506 = vmatprep.subr.mxu0 0.0
    %507 = vmatpush1.msra.mxu0 0.0
    %508 = vmatprep.subr.mxu0 0.0
    %509 = vmatpush1.msra.mxu0 0.0
    %510 = vmatprep.subr.mxu0 0.0
    %511 = vmatpush1.msra.mxu0 0.0
    %512 = vmatprep.subr.mxu0 0.0
    %513 = vmatpush1.msra.mxu0 0.0
    %514 = vmatprep.subr.mxu0 0.0
    %515 = vmatpush1.msra.mxu0 0.0
    %516 = vmatprep.subr.mxu0 0.0
    %517 = vmatpush1.msra.mxu0 0.0
    %518 = vmatprep.subr.mxu0 0.0
    %519 = vmatpush1.msra.mxu0 0.0
    %520 = vmatprep.subr.mxu0 0.0
    %521 = vmatpush1.msra.mxu0 0.0
    %522 = vmatprep.subr.mxu0 0.0
    %523 = vmatpush1.msra.mxu0 0.0
    %524 = vmatprep.subr.mxu0 0.0
    %525 = vmatpush1.msra.mxu0 0.0
    %526 = vmatprep.subr.mxu0 0.0
    %527 = vmatpush1.msra.mxu0 0.0
    %528 = vmatprep.subr.mxu0 0.0
    %529 = vmatpush1.msra.mxu0 0.0
    %530 = vmatprep.subr.mxu0 0.0
    %531 = vmatpush1.msra.mxu0 0.0
    %532 = vmatprep.subr.mxu0 0.0
    %533 = vmatpush1.msra.mxu0 0.0
    %534 = vmatprep.mubr.f32.mxu0 0.0
    %535 = vmatmul.mubr.f32.gmra.mrb[0].mxu0 %v468
    %v536 = vpop.f32.mrb[0].mxu0
    %v537 = vadd.f32 0.0, %v536
    %v538 = vpop.f32.mrb[0].mxu0
    %539 = vdwg.mxu0
    %v541 = vrot.slane %v537, 5
    %v543 = vadd.f32 %v140, %v541
    %v544 = vmul.f32 %v543, 0.5
    %v545 = vtanh.pop %v544
    %v546 = vmul.f32 %v545, 0.5
    %v547 = vadd.f32 %v546, 0.5
    %v548 = vtanh.pop %v543
    %v550 = vrot.slane %v463, 7
    %v552 = vmul.f32 %v547, %v550
    %554 = vrot.lane.b32.xlu0 %v548, 64
    %v555 = vpop.permute.xlu0 %554
    %v557 = vmul.f32 %v547, %v555
    %559 = vrot.lane.b32.xlu0 %v557, 32
    %v560 = vpop.permute.xlu0 %559
    %v562 = vadd.f32 %v552, %v560
    %v563 = vtanh.pop %v562
    %565 = vrot.lane.b32.xlu0 %v563, 64
    %v566 = vpop.permute.xlu0 %565
    %v568 = vmul.f32 %v547, %v566
    %s569 = sld [smem:[#allocation2 + $0x4]]
    %v570 = vstv %s569
    %v571 = vmul.f32 %v568, %v570
    %v572 = vmul.f32 %v562, %v570
    %v574 = vrot.slane %v571, 3
    %575 = vrot.lane.b32.xlu0 %v574, 32
    %v576 = vpop.permute.xlu0 %575
    %v577 = vsel %vm146, %v576, 0
    %579 = vmatprep.subr.mxu0 0.0
    %580 = vmatpush1.msra.mxu0 %v54
    %581 = vmatprep.subr.mxu0 0.0
    %582 = vmatpush1.msra.mxu0 %v55
    %583 = vmatprep.subr.mxu0 0.0
    %584 = vmatpush1.msra.mxu0 %v56
    %585 = vmatprep.subr.mxu0 0.0
    %586 = vmatpush1.msra.mxu0 %v57
    %587 = vmatprep.subr.mxu0 0.0
    %588 = vmatpush1.msra.mxu0 0.0
    %589 = vmatprep.subr.mxu0 0.0
    %590 = vmatpush1.msra.mxu0 0.0
    %591 = vmatprep.subr.mxu0 0.0
    %592 = vmatpush1.msra.mxu0 0.0
    %593 = vmatprep.subr.mxu0 0.0
    %594 = vmatpush1.msra.mxu0 0.0
    %595 = vmatprep.subr.mxu0 0.0
    %596 = vmatpush1.msra.mxu0 0.0
    %597 = vmatprep.subr.mxu0 0.0
    %598 = vmatpush1.msra.mxu0 0.0
    %599 = vmatprep.subr.mxu0 0.0
    %600 = vmatpush1.msra.mxu0 0.0
    %601 = vmatprep.subr.mxu0 0.0
    %602 = vmatpush1.msra.mxu0 0.0
    %603 = vmatprep.subr.mxu0 0.0
    %604 = vmatpush1.msra.mxu0 0.0
    %605 = vmatprep.subr.mxu0 0.0
    %606 = vmatpush1.msra.mxu0 0.0
    %607 = vmatprep.subr.mxu0 0.0
    %608 = vmatpush1.msra.mxu0 0.0
    %609 = vmatprep.subr.mxu0 0.0
    %610 = vmatpush1.msra.mxu0 0.0
    %611 = vmatprep.subr.mxu0 0.0
    %612 = vmatpush1.msra.mxu0 0.0
    %613 = vmatprep.subr.mxu0 0.0
    %614 = vmatpush1.msra.mxu0 0.0
    %615 = vmatprep.subr.mxu0 0.0
    %616 = vmatpush1.msra.mxu0 0.0
    %617 = vmatprep.subr.mxu0 0.0
    %618 = vmatpush1.msra.mxu0 0.0
    %619 = vmatprep.subr.mxu0 0.0
    %620 = vmatpush1.msra.mxu0 0.0
    %621 = vmatprep.subr.mxu0 0.0
    %622 = vmatpush1.msra.mxu0 0.0
    %623 = vmatprep.subr.mxu0 0.0
    %624 = vmatpush1.msra.mxu0 0.0
    %625 = vmatprep.subr.mxu0 0.0
    %626 = vmatpush1.msra.mxu0 0.0
    %627 = vmatprep.subr.mxu0 0.0
    %628 = vmatpush1.msra.mxu0 0.0
    %629 = vmatprep.subr.mxu0 0.0
    %630 = vmatpush1.msra.mxu0 0.0
    %631 = vmatprep.subr.mxu0 0.0
    %632 = vmatpush1.msra.mxu0 0.0
    %633 = vmatprep.subr.mxu0 0.0
    %634 = vmatpush1.msra.mxu0 0.0
    %635 = vmatprep.subr.mxu0 0.0
    %636 = vmatpush1.msra.mxu0 0.0
    %637 = vmatprep.subr.mxu0 0.0
    %638 = vmatpush1.msra.mxu0 0.0
    %639 = vmatprep.subr.mxu0 0.0
    %640 = vmatpush1.msra.mxu0 0.0
    %641 = vmatprep.subr.mxu0 0.0
    %642 = vmatpush1.msra.mxu0 0.0
    %643 = vmatprep.mubr.f32.mxu0 0.0
    %644 = vmatmul.mubr.f32.gmra.mrb[0].mxu0 %v577
    %v645 = vpop.f32.mrb[0].mxu0
    %v646 = vadd.f32 0.0, %v645
    %v647 = vpop.f32.mrb[0].mxu0
    %648 = vdwg.mxu0
    %v650 = vrot.slane %v646, 4
    %v652 = vadd.f32 %v140, %v650
    %v653 = vmul.f32 %v652, 0.5
    %v654 = vtanh.pop %v653
    %v655 = vmul.f32 %v654, 0.5
    %v656 = vadd.f32 %v655, 0.5
    %v657 = vtanh.pop %v652
    %v659 = vrot.slane %v572, 7
    %v661 = vmul.f32 %v656, %v659
    %663 = vrot.lane.b32.xlu0 %v657, 64
    %v664 = vpop.permute.xlu0 %663
    %v666 = vmul.f32 %v656, %v664
    %668 = vrot.lane.b32.xlu0 %v666, 32
    %v669 = vpop.permute.xlu0 %668
    %v671 = vadd.f32 %v661, %v669
    %v672 = vtanh.pop %v671
    %674 = vrot.lane.b32.xlu0 %v672, 64
    %v675 = vpop.permute.xlu0 %674
    %v677 = vmul.f32 %v656, %v675
    %s678 = sld [smem:[#allocation2 + $0x5]]
    %v679 = vstv %s678
    %v680 = vmul.f32 %v677, %v679
    %v681 = vmul.f32 %v671, %v679
    %v683 = vrot.slane %v680, 4
    %684 = vrot.lane.b32.xlu0 %v683, 32
    %v685 = vpop.permute.xlu0 %684
    %v686 = vsel %vm146, %v685, 0
    %688 = vmatprep.subr.mxu0 0.0
    %689 = vmatpush1.msra.mxu0 %v54
    %690 = vmatprep.subr.mxu0 0.0
    %691 = vmatpush1.msra.mxu0 %v55
    %692 = vmatprep.subr.mxu0 0.0
    %693 = vmatpush1.msra.mxu0 %v56
    %694 = vmatprep.subr.mxu0 0.0
    %695 = vmatpush1.msra.mxu0 %v57
    %696 = vmatprep.subr.mxu0 0.0
    %697 = vmatpush1.msra.mxu0 0.0
    %698 = vmatprep.subr.mxu0 0.0
    %699 = vmatpush1.msra.mxu0 0.0
    %700 = vmatprep.subr.mxu0 0.0
    %701 = vmatpush1.msra.mxu0 0.0
    %702 = vmatprep.subr.mxu0 0.0
    %703 = vmatpush1.msra.mxu0 0.0
    %704 = vmatprep.subr.mxu0 0.0
    %705 = vmatpush1.msra.mxu0 0.0
    %706 = vmatprep.subr.mxu0 0.0
    %707 = vmatpush1.msra.mxu0 0.0
    %708 = vmatprep.subr.mxu0 0.0
    %709 = vmatpush1.msra.mxu0 0.0
    %710 = vmatprep.subr.mxu0 0.0
    %711 = vmatpush1.msra.mxu0 0.0
    %712 = vmatprep.subr.mxu0 0.0
    %713 = vmatpush1.msra.mxu0 0.0
    %714 = vmatprep.subr.mxu0 0.0
    %715 = vmatpush1.msra.mxu0 0.0
    %716 = vmatprep.subr.mxu0 0.0
    %717 = vmatpush1.msra.mxu0 0.0
    %718 = vmatprep.subr.mxu0 0.0
    %719 = vmatpush1.msra.mxu0 0.0
    %720 = vmatprep.subr.mxu0 0.0
    %721 = vmatpush1.msra.mxu0 0.0
    %722 = vmatprep.subr.mxu0 0.0
    %723 = vmatpush1.msra.mxu0 0.0
    %724 = vmatprep.subr.mxu0 0.0
    %725 = vmatpush1.msra.mxu0 0.0
    %726 = vmatprep.subr.mxu0 0.0
    %727 = vmatpush1.msra.mxu0 0.0
    %728 = vmatprep.subr.mxu0 0.0
    %729 = vmatpush1.msra.mxu0 0.0
    %730 = vmatprep.subr.mxu0 0.0
    %731 = vmatpush1.msra.mxu0 0.0
    %732 = vmatprep.subr.mxu0 0.0
    %733 = vmatpush1.msra.mxu0 0.0
    %734 = vmatprep.subr.mxu0 0.0
    %735 = vmatpush1.msra.mxu0 0.0
    %736 = vmatprep.subr.mxu0 0.0
    %737 = vmatpush1.msra.mxu0 0.0
    %738 = vmatprep.subr.mxu0 0.0
    %739 = vmatpush1.msra.mxu0 0.0
    %740 = vmatprep.subr.mxu0 0.0
    %741 = vmatpush1.msra.mxu0 0.0
    %742 = vmatprep.subr.mxu0 0.0
    %743 = vmatpush1.msra.mxu0 0.0
    %744 = vmatprep.subr.mxu0 0.0
    %745 = vmatpush1.msra.mxu0 0.0
    %746 = vmatprep.subr.mxu0 0.0
    %747 = vmatpush1.msra.mxu0 0.0
    %748 = vmatprep.subr.mxu0 0.0
    %749 = vmatpush1.msra.mxu0 0.0
    %750 = vmatprep.subr.mxu0 0.0
    %751 = vmatpush1.msra.mxu0 0.0
    %752 = vmatprep.mubr.f32.mxu0 0.0
    %753 = vmatmul.mubr.f32.gmra.mrb[0].mxu0 %v686
    %v754 = vpop.f32.mrb[0].mxu0
    %v755 = vadd.f32 0.0, %v754
    %v756 = vpop.f32.mrb[0].mxu0
    %757 = vdwg.mxu0
    %v759 = vrot.slane %v755, 3
    %v761 = vadd.f32 %v140, %v759
    %v762 = vmul.f32 %v761, 0.5
    %v763 = vtanh.pop %v762
    %v764 = vmul.f32 %v763, 0.5
    %v765 = vadd.f32 %v764, 0.5
    %v766 = vtanh.pop %v761
    %v768 = vrot.slane %v681, 7
    %v770 = vmul.f32 %v765, %v768
    %772 = vrot.lane.b32.xlu0 %v766, 64
    %v773 = vpop.permute.xlu0 %772
    %v775 = vmul.f32 %v765, %v773
    %777 = vrot.lane.b32.xlu0 %v775, 32
    %v778 = vpop.permute.xlu0 %777
    %v780 = vadd.f32 %v770, %v778
    %v781 = vtanh.pop %v780
    %783 = vrot.lane.b32.xlu0 %v781, 64
    %v784 = vpop.permute.xlu0 %783
    %v786 = vmul.f32 %v765, %v784
    %s787 = sld [smem:[#allocation2 + $0x6]]
    %v788 = vstv %s787
    %v789 = vmul.f32 %v786, %v788
    %v790 = vmul.f32 %v780, %v788
    %v792 = vrot.slane %v789, 5
    %793 = vrot.lane.b32.xlu0 %v792, 32
    %v794 = vpop.permute.xlu0 %793
    %v795 = vsel %vm146, %v794, 0
    %797 = vmatprep.subr.mxu0 0.0
    %798 = vmatpush1.msra.mxu0 %v54
    %799 = vmatprep.subr.mxu0 0.0
    %800 = vmatpush1.msra.mxu0 %v55
    %801 = vmatprep.subr.mxu0 0.0
    %802 = vmatpush1.msra.mxu0 %v56
    %803 = vmatprep.subr.mxu0 0.0
    %804 = vmatpush1.msra.mxu0 %v57
    %805 = vmatprep.subr.mxu0 0.0
    %806 = vmatpush1.msra.mxu0 0.0
    %807 = vmatprep.subr.mxu0 0.0
    %808 = vmatpush1.msra.mxu0 0.0
    %809 = vmatprep.subr.mxu0 0.0
    %810 = vmatpush1.msra.mxu0 0.0
    %811 = vmatprep.subr.mxu0 0.0
    %812 = vmatpush1.msra.mxu0 0.0
    %813 = vmatprep.subr.mxu0 0.0
    %814 = vmatpush1.msra.mxu0 0.0
    %815 = vmatprep.subr.mxu0 0.0
    %816 = vmatpush1.msra.mxu0 0.0
    %817 = vmatprep.subr.mxu0 0.0
    %818 = vmatpush1.msra.mxu0 0.0
    %819 = vmatprep.subr.mxu0 0.0
    %820 = vmatpush1.msra.mxu0 0.0
    %821 = vmatprep.subr.mxu0 0.0
    %822 = vmatpush1.msra.mxu0 0.0
    %823 = vmatprep.subr.mxu0 0.0
    %824 = vmatpush1.msra.mxu0 0.0
    %825 = vmatprep.subr.mxu0 0.0
    %826 = vmatpush1.msra.mxu0 0.0
    %827 = vmatprep.subr.mxu0 0.0
    %828 = vmatpush1.msra.mxu0 0.0
    %829 = vmatprep.subr.mxu0 0.0
    %830 = vmatpush1.msra.mxu0 0.0
    %831 = vmatprep.subr.mxu0 0.0
    %832 = vmatpush1.msra.mxu0 0.0
    %833 = vmatprep.subr.mxu0 0.0
    %834 = vmatpush1.msra.mxu0 0.0
    %835 = vmatprep.subr.mxu0 0.0
    %836 = vmatpush1.msra.mxu0 0.0
    %837 = vmatprep.subr.mxu0 0.0
    %838 = vmatpush1.msra.mxu0 0.0
    %839 = vmatprep.subr.mxu0 0.0
    %840 = vmatpush1.msra.mxu0 0.0
    %841 = vmatprep.subr.mxu0 0.0
    %842 = vmatpush1.msra.mxu0 0.0
    %843 = vmatprep.subr.mxu0 0.0
    %844 = vmatpush1.msra.mxu0 0.0
    %845 = vmatprep.subr.mxu0 0.0
    %846 = vmatpush1.msra.mxu0 0.0
    %847 = vmatprep.subr.mxu0 0.0
    %848 = vmatpush1.msra.mxu0 0.0
    %849 = vmatprep.subr.mxu0 0.0
    %850 = vmatpush1.msra.mxu0 0.0
    %851 = vmatprep.subr.mxu0 0.0
    %852 = vmatpush1.msra.mxu0 0.0
    %853 = vmatprep.subr.mxu0 0.0
    %854 = vmatpush1.msra.mxu0 0.0
    %855 = vmatprep.subr.mxu0 0.0
    %856 = vmatpush1.msra.mxu0 0.0
    %857 = vmatprep.subr.mxu0 0.0
    %858 = vmatpush1.msra.mxu0 0.0
    %859 = vmatprep.subr.mxu0 0.0
    %860 = vmatpush1.msra.mxu0 0.0
    %861 = vmatprep.mubr.f32.mxu0 0.0
    %862 = vmatmul.mubr.f32.gmra.mrb[0].mxu0 %v795
    %v863 = vpop.f32.mrb[0].mxu0
    %v864 = vadd.f32 0.0, %v863
    %v865 = vpop.f32.mrb[0].mxu0
    %866 = vdwg.mxu0
    %v868 = vrot.slane %v864, 2
    %v870 = vadd.f32 %v140, %v868
    %v871 = vmul.f32 %v870, 0.5
    %v872 = vtanh.pop %v871
    %v873 = vmul.f32 %v872, 0.5
    %v874 = vadd.f32 %v873, 0.5
    %v875 = vtanh.pop %v870
    %v877 = vrot.slane %v790, 7
    %v879 = vmul.f32 %v874, %v877
    %881 = vrot.lane.b32.xlu0 %v875, 64
    %v882 = vpop.permute.xlu0 %881
    %v884 = vmul.f32 %v874, %v882
    %886 = vrot.lane.b32.xlu0 %v884, 32
    %v887 = vpop.permute.xlu0 %886
    %v889 = vadd.f32 %v879, %v887
    %v890 = vtanh.pop %v889
    %892 = vrot.lane.b32.xlu0 %v890, 64
    %v893 = vpop.permute.xlu0 %892
    %v895 = vmul.f32 %v874, %v893
    %s896 = sld [smem:[#allocation2 + $0x7]]
    %v897 = vstv %s896
    %v898 = vmul.f32 %v895, %v897
    %v899 = vmul.f32 %v889, %v897
    %v901 = vrot.slane %v898, 6
    %902 = vrot.lane.b32.xlu0 %v901, 32
    %v903 = vpop.permute.xlu0 %902
    %v904 = vsel %vm146, %v903, 0
    %906 = vmatprep.subr.mxu0 0.0
    %907 = vmatpush1.msra.mxu0 %v54
    %908 = vmatprep.subr.mxu0 0.0
    %909 = vmatpush1.msra.mxu0 %v55
    %910 = vmatprep.subr.mxu0 0.0
    %911 = vmatpush1.msra.mxu0 %v56
    %912 = vmatprep.subr.mxu0 0.0
    %913 = vmatpush1.msra.mxu0 %v57
    %914 = vmatprep.subr.mxu0 0.0
    %915 = vmatpush1.msra.mxu0 0.0
    %916 = vmatprep.subr.mxu0 0.0
    %917 = vmatpush1.msra.mxu0 0.0
    %918 = vmatprep.subr.mxu0 0.0
    %919 = vmatpush1.msra.mxu0 0.0
    %920 = vmatprep.subr.mxu0 0.0
    %921 = vmatpush1.msra.mxu0 0.0
    %922 = vmatprep.subr.mxu0 0.0
    %923 = vmatpush1.msra.mxu0 0.0
    %924 = vmatprep.subr.mxu0 0.0
    %925 = vmatpush1.msra.mxu0 0.0
    %926 = vmatprep.subr.mxu0 0.0
    %927 = vmatpush1.msra.mxu0 0.0
    %928 = vmatprep.subr.mxu0 0.0
    %929 = vmatpush1.msra.mxu0 0.0
    %930 = vmatprep.subr.mxu0 0.0
    %931 = vmatpush1.msra.mxu0 0.0
    %932 = vmatprep.subr.mxu0 0.0
    %933 = vmatpush1.msra.mxu0 0.0
    %934 = vmatprep.subr.mxu0 0.0
    %935 = vmatpush1.msra.mxu0 0.0
    %936 = vmatprep.subr.mxu0 0.0
    %937 = vmatpush1.msra.mxu0 0.0
    %938 = vmatprep.subr.mxu0 0.0
    %939 = vmatpush1.msra.mxu0 0.0
    %940 = vmatprep.subr.mxu0 0.0
    %941 = vmatpush1.msra.mxu0 0.0
    %942 = vmatprep.subr.mxu0 0.0
    %943 = vmatpush1.msra.mxu0 0.0
    %944 = vmatprep.subr.mxu0 0.0
    %945 = vmatpush1.msra.mxu0 0.0
    %946 = vmatprep.subr.mxu0 0.0
    %947 = vmatpush1.msra.mxu0 0.0
    %948 = vmatprep.subr.mxu0 0.0
    %949 = vmatpush1.msra.mxu0 0.0
    %950 = vmatprep.subr.mxu0 0.0
    %951 = vmatpush1.msra.mxu0 0.0
    %952 = vmatprep.subr.mxu0 0.0
    %953 = vmatpush1.msra.mxu0 0.0
    %954 = vmatprep.subr.mxu0 0.0
    %955 = vmatpush1.msra.mxu0 0.0
    %956 = vmatprep.subr.mxu0 0.0
    %957 = vmatpush1.msra.mxu0 0.0
    %958 = vmatprep.subr.mxu0 0.0
    %959 = vmatpush1.msra.mxu0 0.0
    %960 = vmatprep.subr.mxu0 0.0
    %961 = vmatpush1.msra.mxu0 0.0
    %962 = vmatprep.subr.mxu0 0.0
    %963 = vmatpush1.msra.mxu0 0.0
    %964 = vmatprep.subr.mxu0 0.0
    %965 = vmatpush1.msra.mxu0 0.0
    %966 = vmatprep.subr.mxu0 0.0
    %967 = vmatpush1.msra.mxu0 0.0
    %968 = vmatprep.subr.mxu0 0.0
    %969 = vmatpush1.msra.mxu0 0.0
    %970 = vmatprep.mubr.f32.mxu0 0.0
    %971 = vmatmul.mubr.f32.gmra.mrb[0].mxu0 %v904
    %v972 = vpop.f32.mrb[0].mxu0
    %v973 = vadd.f32 0.0, %v972
    %v974 = vpop.f32.mrb[0].mxu0
    %975 = vdwg.mxu0
    %v977 = vrot.slane %v973, 1
    %v979 = vadd.f32 %v140, %v977
    %v980 = vmul.f32 %v979, 0.5
    %v981 = vtanh.pop %v980
    %v982 = vmul.f32 %v981, 0.5
    %v983 = vadd.f32 %v982, 0.5
    %v984 = vtanh.pop %v979
    %v986 = vrot.slane %v899, 7
    %v988 = vmul.f32 %v983, %v986
    %990 = vrot.lane.b32.xlu0 %v984, 64
    %v991 = vpop.permute.xlu0 %990
    %v993 = vmul.f32 %v983, %v991
    %995 = vrot.lane.b32.xlu0 %v993, 32
    %v996 = vpop.permute.xlu0 %995
    %v998 = vadd.f32 %v988, %v996
    %v999 = vtanh.pop %v998
    %1001 = vrot.lane.b32.xlu0 %v999, 64
    %v1002 = vpop.permute.xlu0 %1001
    %v1004 = vmul.f32 %v983, %v1002
    %vm1005 = vcmask 1040384
    %v1006 = vsel %vm1005, %v242, %v350
    %vm1007 = vcmask 1041408
    %v1008 = vsel %vm1007, %v1006, %v459
    %vm1009 = vcmask 1042432
    %v1010 = vsel %vm1009, %v1008, %v568
    %vm1011 = vcmask 1043456
    %v1012 = vsel %vm1011, %v1010, %v677
    %vm1013 = vcmask 1044480
    %v1014 = vsel %vm1013, %v1012, %v786
    %vm1015 = vcmask 1045504
    %v1016 = vsel %vm1015, %v1014, %v895
    %vm1017 = vcmask 1046528
    %v1018 = vsel %vm1017, %v1016, %v1004
    %v1019 = vlaneseq
    %v1020 = vshrl.u32 %v1019, 7
    %v1021 = vsub.s32 0, %v1020
    %v1022 = vrot.slane %v63, %v1021
    %1024 = vrot.lane.b32.xlu0 %v1018, 32
    %v1025 = vpop.permute.xlu0 %1024
    %v1026 = vsel %vm146, %v1025, 0
    %1028 = vmatprep.subr.mxu0 0.0
    %1029 = vmatpush1.msra.mxu0 %v59
    %1030 = vmatprep.subr.mxu0 0.0
    %1031 = vmatpush1.msra.mxu0 %v60
    %1032 = vmatprep.subr.mxu0 0.0
    %1033 = vmatpush1.msra.mxu0 %v61
    %1034 = vmatprep.subr.mxu0 0.0
    %1035 = vmatpush1.msra.mxu0 %v62
    %1036 = vmatprep.subr.mxu0 0.0
    %1037 = vmatpush1.msra.mxu0 0.0
    %1038 = vmatprep.subr.mxu0 0.0
    %1039 = vmatpush1.msra.mxu0 0.0
    %1040 = vmatprep.subr.mxu0 0.0
    %1041 = vmatpush1.msra.mxu0 0.0
    %1042 = vmatprep.subr.mxu0 0.0
    %1043 = vmatpush1.msra.mxu0 0.0
    %1044 = vmatprep.subr.mxu0 0.0
    %1045 = vmatpush1.msra.mxu0 0.0
    %1046 = vmatprep.subr.mxu0 0.0
    %1047 = vmatpush1.msra.mxu0 0.0
    %1048 = vmatprep.subr.mxu0 0.0
    %1049 = vmatpush1.msra.mxu0 0.0
    %1050 = vmatprep.subr.mxu0 0.0
    %1051 = vmatpush1.msra.mxu0 0.0
    %1052 = vmatprep.subr.mxu0 0.0
    %1053 = vmatpush1.msra.mxu0 0.0
    %1054 = vmatprep.subr.mxu0 0.0
    %1055 = vmatpush1.msra.mxu0 0.0
    %1056 = vmatprep.subr.mxu0 0.0
    %1057 = vmatpush1.msra.mxu0 0.0
    %1058 = vmatprep.subr.mxu0 0.0
    %1059 = vmatpush1.msra.mxu0 0.0
    %1060 = vmatprep.subr.mxu0 0.0
    %1061 = vmatpush1.msra.mxu0 0.0
    %1062 = vmatprep.subr.mxu0 0.0
    %1063 = vmatpush1.msra.mxu0 0.0
    %1064 = vmatprep.subr.mxu0 0.0
    %1065 = vmatpush1.msra.mxu0 0.0
    %1066 = vmatprep.subr.mxu0 0.0
    %1067 = vmatpush1.msra.mxu0 0.0
    %1068 = vmatprep.subr.mxu0 0.0
    %1069 = vmatpush1.msra.mxu0 0.0
    %1070 = vmatprep.subr.mxu0 0.0
    %1071 = vmatpush1.msra.mxu0 0.0
    %1072 = vmatprep.subr.mxu0 0.0
    %1073 = vmatpush1.msra.mxu0 0.0
    %1074 = vmatprep.subr.mxu0 0.0
    %1075 = vmatpush1.msra.mxu0 0.0
    %1076 = vmatprep.subr.mxu0 0.0
    %1077 = vmatpush1.msra.mxu0 0.0
    %1078 = vmatprep.subr.mxu0 0.0
    %1079 = vmatpush1.msra.mxu0 0.0
    %1080 = vmatprep.subr.mxu0 0.0
    %1081 = vmatpush1.msra.mxu0 0.0
    %1082 = vmatprep.subr.mxu0 0.0
    %1083 = vmatpush1.msra.mxu0 0.0
    %1084 = vmatprep.subr.mxu0 0.0
    %1085 = vmatpush1.msra.mxu0 0.0
    %1086 = vmatprep.subr.mxu0 0.0
    %1087 = vmatpush1.msra.mxu0 0.0
    %1088 = vmatprep.subr.mxu0 0.0
    %1089 = vmatpush1.msra.mxu0 0.0
    %1090 = vmatprep.subr.mxu0 0.0
    %1091 = vmatpush1.msra.mxu0 0.0
    %1092 = vmatprep.mubr.f32.mxu0 0.0
    %1093 = vmatmul.mubr.f32.gmra.mrb[0].mxu0 %v1026
    %v1094 = vpop.f32.mrb[0].mxu0
    %v1095 = vadd.f32 %v1022, %v1094
    %v1096 = vpop.f32.mrb[0].mxu0
    %1097 = vdwg.mxu0
    %1098 = vmax.xlane.f32.xlu0 %v1095
    %v1099 = vpop.xlane.xlu0 %1098
    %v1100 = vsub.f32 %v1095, %v1099
    %v1101 = vmul.f32 %v1100, 1.442695
    %v1102 = vpow.pop %v1101
    %1103 = vadd.xlane.f32.xlu0 %v1102
    %v1104 = vpop.xlane.xlu0 %1103
    %v1105 = vrcp.pop %v1104
    %v1106 = vmul.f32 %v1102, %v1105
    %1107 = vst [vmem:[#allocation9] sm:$0xff] %v1106
    // Predicated region
    $region26: #{tpu_custom_call.1} parent=1 // pred_check
      _
    $region27: #{tpu_custom_call.1} parent=1 // pred_check_branch
      %1109 = sbr.rel (0) target = $region29
    $region28: #{tpu_custom_call.1} parent=1 // pred_region
      %s1111 = ssub.s32 128, 128
      %1112 = vsyncadd [#allocation4], %s1111
      %s1114 = sshll.u32 [#allocation9], 4
      %s1115 = int_to_ptr.vmem [resolvable:$true] %s1114
      %1117 = dma.vmem_to_hbm [thread:$0]  %s1115, 128, %s3, [#allocation4]
    $region29: #{tpu_custom_call.1} parent=1 // pred_fallthru
      _
    // Predicated region
    $region30: #{tpu_custom_call.1} parent=1 // pred_check
      _
    $region31: #{tpu_custom_call.1} parent=1 // pred_check_branch
      %1119 = sbr.rel (0) target = $region33
    $region32: #{tpu_custom_call.1} parent=1 // pred_region
      %1120 = dma.done [#allocation4], 128
    $region33: #{tpu_custom_call.1} parent=1 // pred_fallthru
      _
    %1121 = vsyncpa [#allocation3], 1
    %1122 = vsyncpa [#allocation8], 1
    %1123 = vsyncpa [#allocation4], 1
    %1124 = vsyncpa [#allocation5], 1

</llo_original>
